<compile_context>
chip_gen: v7x
topology: tpu7x:2x2x1
jax: 0.10.0
libtpu: 0.0.40
codegen_flags: <defaults>
</compile_context>

<pallas_src>
import functools

import jax
import jax.numpy as jnp
from jax.experimental import pallas as pl
from jax.experimental.pallas import tpu as pltpu

_LANES = 128
_SUBLANES = 8
# Sublane alignment that satisfies packing for f32 (8), bf16 (16), int8/bool (32).
_ROW_ALIGN = 32


def _round_up(x, m):
    return ((x + m - 1) // m) * m


def _default_num_chunks():
    """2 chunks only on dual-TensorCore chips (v7x); 1 on v5e/v6e."""
    try:
        kind = jax.devices()[0].device_kind.lower()
    except Exception:
        return 1
    # TODO(synk): on v7x verify "parallel" actually shards across the 2 TCs;
    # if not, switch the chunk axis to pltpu.CORE_PARALLEL.
    return 2 if "v7" in kind else 1


def _bce_kernel(pred_ref, target_ref, out_ref, acc_ref, *,
                rows_valid, block_rows, inner_steps, binary_targets):
    c = pl.program_id(0)   # megacore chunk axis ("parallel")
    i = pl.program_id(1)   # reduction axis ("arbitrary")

    @pl.when(i == 0)
    def _():
        acc_ref[...] = jnp.zeros_like(acc_ref)

    p = pred_ref[...].astype(jnp.float32)
    t = target_ref[...].astype(jnp.float32)

    # PyTorch BCELoss clamps each log term at -100 for numerical stability.
    # (No in-kernel guarantee that p is in (0,1); like PyTorch, p>1 -> NaN.)
    if binary_targets:
        # Fast path for hard {0,1} labels: a single log (EUP op) per element.
        loss = -jnp.maximum(jnp.log(jnp.where(t >= 0.5, p, 1.0 - p)), -100.0)
    else:
        log_p = jnp.maximum(jnp.log(p), -100.0)
        log_1mp = jnp.maximum(jnp.log(1.0 - p), -100.0)
        loss = -(t * log_p + (1.0 - t) * log_1mp)

    # Un-clamped logical block index; blocks past `total_blocks-1` are clamped
    # re-reads of a valid block by the index_map and must contribute zero.
    block_idx = c * inner_steps + i
    needs_mask = (block_idx + 1) * block_rows > rows_valid

    # Interior blocks: pure unmasked VPU accumulate (no iota/compare/select).
    @pl.when(jnp.logical_not(needs_mask))
    def _():
        acc_ref[...] += loss.reshape(-1, _SUBLANES, _LANES).sum(axis=0)

    # Tail / duplicate blocks only: mask rows past the true extent.  jnp.where
    # is a select, so garbage/NaN in out-of-range rows is discarded (do NOT
    # refactor to multiplicative masking).
    @pl.when(needs_mask)
    def _():
        row_ids = block_idx * block_rows + jax.lax.broadcasted_iota(
            jnp.int32, loss.shape, 0)
        masked = jnp.where(row_ids < rows_valid, loss, 0.0)
        acc_ref[...] += masked.reshape(-1, _SUBLANES, _LANES).sum(axis=0)

    @pl.when(i == pl.num_programs(1) - 1)
    def _():
        out_ref[0, 0] = jnp.sum(acc_ref[...])


def bce_loss(pred, target, *, block_rows=4096, num_chunks=None,
             binary_targets=False):
    """Mean BCE loss over all elements of pred/target (same shape)."""
    assert pred.shape == target.shape
    total_count = 1
    for d in pred.shape:
        total_count *= int(d)

    flat_p = pred.reshape(-1)
    flat_t = target.reshape(-1)

    # Lane-aligned (rows, 128) view; copy-free when total_count % 128 == 0.
    # Otherwise pad minimally with pred=1, target=1 (exactly zero loss under
    # the -100 clamp), keeping the true element count for the mean.
    # TODO(synk): the pad costs one extra HBM pass in the (rare) non-multiple
    # case; a truly copy-free fix needs a 1-D lane-major kernel layout.
    m = flat_p.shape[0]
    m_pad = _round_up(m, _LANES)
    if m_pad != m:
        flat_p = jnp.pad(flat_p, (0, m_pad - m), constant_values=1)
        flat_t = jnp.pad(flat_t, (0, m_pad - m), constant_values=1)
    rows = m_pad // _LANES
    p2 = flat_p.reshape(rows, _LANES)
    t2 = flat_t.reshape(rows, _LANES)

    # ~2 MiB f32 per input block by default; sublane dim aligned for any dtype.
    block_rows = max(_ROW_ALIGN, min(block_rows, _round_up(rows, _ROW_ALIGN)))
    block_rows = _round_up(block_rows, _ROW_ALIGN)
    total_blocks = pl.cdiv(rows, block_rows)

    if num_chunks is None:
        num_chunks = _default_num_chunks()
    num_chunks = max(1, min(int(num_chunks), total_blocks))
    inner_steps = pl.cdiv(total_blocks, num_chunks)

    def in_map(c, i):
        # Clamp so any over-allocated step of the last chunk re-reads a valid
        # block; its contribution is masked to zero inside the kernel.
        return (jnp.minimum(c * inner_steps + i, total_blocks - 1), 0)

    kernel = functools.partial(
        _bce_kernel,
        rows_valid=rows,
        block_rows=block_rows,
        inner_steps=inner_steps,
        binary_targets=binary_targets,
    )

    # Scoped-VMEM budget: inputs are double-buffered (2 inputs x 2 bufs) plus
    # a few f32 block-sized intermediates.  32 MiB floor lifts v5e's 16 MiB
    # default; 64 MiB cap respects v7x's physical VMEM.
    block_bytes_f32 = block_rows * _LANES * 4
    vmem_limit = int(min(64 * 1024 * 1024,
                         max(32 * 1024 * 1024, 12 * block_bytes_f32)))

    n_elems = rows * _LANES
    cost = pl.CostEstimate(
        flops=6 * n_elems,
        transcendentals=(1 if binary_targets else 2) * n_elems,
        bytes_accessed=int(p2.size * p2.dtype.itemsize
                           + t2.size * t2.dtype.itemsize
                           + num_chunks * 4),
    )

    partials = pl.pallas_call(
        kernel,
        out_shape=jax.ShapeDtypeStruct((num_chunks, 1), jnp.float32),
        grid_spec=pltpu.PrefetchScalarGridSpec(
            num_scalar_prefetch=0,
            grid=(num_chunks, inner_steps),
            in_specs=[
                pl.BlockSpec((block_rows, _LANES), in_map),
                pl.BlockSpec((block_rows, _LANES), in_map),
            ],
            out_specs=pl.BlockSpec((1, 1), lambda c, i: (c, 0),
                                   memory_space=pltpu.SMEM),
            scratch_shapes=[pltpu.VMEM((_SUBLANES, _LANES), jnp.float32)],
        ),
        compiler_params=pltpu.CompilerParams(
            dimension_semantics=("parallel", "arbitrary"),
            vmem_limit_bytes=vmem_limit,
        ),
        cost_estimate=cost,
    )(p2, t2)

    return jnp.sum(partials) / jnp.float32(total_count)


if __name__ == "__main__":
    key = jax.random.PRNGKey(0)
    k1, k2 = jax.random.split(key)

    # Small shapes consistent with a segmentation-style BCE usage (NCHW).
    shape = (2, 4, 16, 16)
    # pred must be a probability in (0, 1); emulate sigmoid outputs.
    pred = jax.nn.sigmoid(jax.random.normal(k1, shape, dtype=jnp.float32))
    # binary targets in {0, 1}
    target = (jax.random.uniform(k2, shape) > 0.5).astype(jnp.float32)

    loss = bce_loss(pred, target)
    loss = jax.block_until_ready(loss)

    # Pure-JAX reference check (PyTorch BCELoss semantics incl. -100 clamp).
    p = pred.reshape(shape[0], -1)
    t = target.reshape(shape[0], -1)
    ref = jnp.mean(
        -(t * jnp.maximum(jnp.log(p), -100.0)
          + (1.0 - t) * jnp.maximum(jnp.log(1.0 - p), -100.0))
    )
    assert jnp.allclose(loss, ref, rtol=1e-5, atol=1e-6), (loss, ref)

    print("KERNEL_OK")
</pallas_src>

<mosaic_0001>
module attributes {stable_mosaic.version = 11 : i64} {
  func.func @_bce_kernel(%arg0: i32, %arg1: i32, %arg2: memref<32x128xf32, #tpu.memory_space<vmem>>, %arg3: memref<32x128xf32, #tpu.memory_space<vmem>>, %arg4: memref<1x1xf32, #tpu.memory_space<smem>>, %arg5: memref<8x128xf32, #tpu.memory_space<vmem>>) attributes {dimension_semantics = [#tpu.dimension_semantics<parallel>, #tpu.dimension_semantics<arbitrary>], iteration_bounds = array<i64: 1, 1>, scalar_prefetch = 0 : i64, scratch_operands = 1 : i64, tpu.core_type = #tpu.core_type<tc>, window_params = [{transform_indices = @transform_0, window_bounds = array<i64: 32, 128>}, {transform_indices = @transform_1, window_bounds = array<i64: 32, 128>}, {transform_indices = @transform_2, window_bounds = array<i64: 1, 1>}]} {
    %c0_i32 = arith.constant 0 : i32
    %0 = arith.cmpi eq, %arg1, %c0_i32 : i32
    %1 = arith.extui %0 : i1 to i32
    %c0_i32_0 = arith.constant 0 : i32
    %2 = arith.cmpi ne, %1, %c0_i32_0 : i32
    scf.if %2 {
      %cst_13 = arith.constant 0.000000e+00 : f32
      %33 = vector.broadcast %cst_13 : f32 to vector<8x128xf32>
      %c0_14 = arith.constant 0 : index
      %c0_15 = arith.constant 0 : index
      %34 = vector.load %arg5[%c0_14, %c0_15] : memref<8x128xf32, #tpu.memory_space<vmem>>, vector<8x128xf32>
      tpu.vector_store %arg5[%c0_14, %c0_15], %33 {strides = array<i32>} : memref<8x128xf32, #tpu.memory_space<vmem>>, vector<8x128xf32>,
    } else {
    }
    %c0 = arith.constant 0 : index
    %c0_1 = arith.constant 0 : index
    %3 = vector.load %arg2[%c0, %c0_1] : memref<32x128xf32, #tpu.memory_space<vmem>>, vector<32x128xf32>
    %c0_2 = arith.constant 0 : index
    %c0_3 = arith.constant 0 : index
    %4 = vector.load %arg3[%c0_2, %c0_3] : memref<32x128xf32, #tpu.memory_space<vmem>>, vector<32x128xf32>
    %5 = math.log %3 : vector<32x128xf32>
    %cst = arith.constant -1.000000e+02 : f32
    %6 = vector.broadcast %cst : f32 to vector<32x128xf32>
    %7 = arith.maximumf %5, %6 : vector<32x128xf32>
    %cst_4 = arith.constant 1.000000e+00 : f32
    %8 = vector.broadcast %cst_4 : f32 to vector<32x128xf32>
    %9 = arith.subf %8, %3 : vector<32x128xf32>
    %10 = math.log %9 : vector<32x128xf32>
    %cst_5 = arith.constant -1.000000e+02 : f32
    %11 = vector.broadcast %cst_5 : f32 to vector<32x128xf32>
    %12 = arith.maximumf %10, %11 : vector<32x128xf32>
    %13 = arith.mulf %4, %7 : vector<32x128xf32>
    %cst_6 = arith.constant 1.000000e+00 : f32
    %14 = vector.broadcast %cst_6 : f32 to vector<32x128xf32>
    %15 = arith.subf %14, %4 : vector<32x128xf32>
    %16 = arith.mulf %15, %12 : vector<32x128xf32>
    %17 = arith.addf %13, %16 : vector<32x128xf32>
    %cst_7 = arith.constant 0.000000e+00 : f32
    %18 = vector.broadcast %cst_7 : f32 to vector<32x128xf32>
    %19 = arith.subf %18, %17 : vector<32x128xf32>
    %c1_i32 = arith.constant 1 : i32
    %20 = arith.muli %arg0, %c1_i32 : i32
    %21 = arith.addi %20, %arg1 : i32
    %c1_i32_8 = arith.constant 1 : i32
    %22 = arith.addi %21, %c1_i32_8 : i32
    %c32_i32 = arith.constant 32 : i32
    %23 = arith.muli %22, %c32_i32 : i32
    %c16_i32 = arith.constant 16 : i32
    %24 = arith.cmpi sgt, %23, %c16_i32 : i32
    %true = arith.constant true
    %25 = arith.xori %24, %true : i1
    %26 = arith.extui %25 : i1 to i32
    %c0_i32_9 = arith.constant 0 : i32
    %27 = arith.cmpi ne, %26, %c0_i32_9 : i32
    scf.if %27 {
      %c0_13 = arith.constant 0 : index
      %c0_14 = arith.constant 0 : index
      %33 = vector.load %arg5[%c0_13, %c0_14] : memref<8x128xf32, #tpu.memory_space<vmem>>, vector<8x128xf32>
      %34 = vector.shape_cast %19 : vector<32x128xf32> to vector<4x8x128xf32>
      %cst_15 = arith.constant dense<0.000000e+00> : vector<8x128xf32>
      %35 = vector.multi_reduction <add>, %34, %cst_15 [0] : vector<4x8x128xf32> to vector<8x128xf32>
      %36 = arith.addf %33, %35 : vector<8x128xf32>
      %c0_16 = arith.constant 0 : index
      %c0_17 = arith.constant 0 : index
      %37 = vector.load %arg5[%c0_16, %c0_17] : memref<8x128xf32, #tpu.memory_space<vmem>>, vector<8x128xf32>
      tpu.vector_store %arg5[%c0_16, %c0_17], %36 {strides = array<i32>} : memref<8x128xf32, #tpu.memory_space<vmem>>, vector<8x128xf32>,
    } else {
    }
    %28 = arith.extui %24 : i1 to i32
    %c0_i32_10 = arith.constant 0 : i32
    %29 = arith.cmpi ne, %28, %c0_i32_10 : i32
    scf.if %29 {
      %c32_i32_13 = arith.constant 32 : i32
      %33 = arith.muli %21, %c32_i32_13 : i32
      %34 = tpu.iota {dimensions = array<i32: 0>} : vector<32x128xi32>
      %35 = vector.broadcast %33 : i32 to vector<32x128xi32>
      %36 = arith.addi %35, %34 : vector<32x128xi32>
      %c16_i32_14 = arith.constant 16 : i32
      %37 = vector.broadcast %c16_i32_14 : i32 to vector<32x128xi32>
      %38 = arith.cmpi slt, %36, %37 : vector<32x128xi32>
      %cst_15 = arith.constant 0.000000e+00 : f32
      %39 = vector.broadcast %cst_15 : f32 to vector<32x128xf32>
      %40 = arith.select %38, %19, %39 : vector<32x128xi1>, vector<32x128xf32>
      %c0_16 = arith.constant 0 : index
      %c0_17 = arith.constant 0 : index
      %41 = vector.load %arg5[%c0_16, %c0_17] : memref<8x128xf32, #tpu.memory_space<vmem>>, vector<8x128xf32>
      %42 = vector.shape_cast %40 : vector<32x128xf32> to vector<4x8x128xf32>
      %cst_18 = arith.constant dense<0.000000e+00> : vector<8x128xf32>
      %43 = vector.multi_reduction <add>, %42, %cst_18 [0] : vector<4x8x128xf32> to vector<8x128xf32>
      %44 = arith.addf %41, %43 : vector<8x128xf32>
      %c0_19 = arith.constant 0 : index
      %c0_20 = arith.constant 0 : index
      %45 = vector.load %arg5[%c0_19, %c0_20] : memref<8x128xf32, #tpu.memory_space<vmem>>, vector<8x128xf32>
      tpu.vector_store %arg5[%c0_19, %c0_20], %44 {strides = array<i32>} : memref<8x128xf32, #tpu.memory_space<vmem>>, vector<8x128xf32>,
    } else {
    }
    %c0_i32_11 = arith.constant 0 : i32
    %30 = arith.cmpi eq, %arg1, %c0_i32_11 : i32
    %31 = arith.extui %30 : i1 to i32
    %c0_i32_12 = arith.constant 0 : i32
    %32 = arith.cmpi ne, %31, %c0_i32_12 : i32
    scf.if %32 {
      %c0_13 = arith.constant 0 : index
      %c0_14 = arith.constant 0 : index
      %33 = vector.load %arg5[%c0_13, %c0_14] : memref<8x128xf32, #tpu.memory_space<vmem>>, vector<8x128xf32>
      %34 = vector.shape_cast %33 : vector<8x128xf32> to vector<1x8x128xf32>
      %cst_15 = arith.constant dense<0.000000e+00> : vector<1xf32>
      %35 = vector.multi_reduction <add>, %34, %cst_15 [1, 2] : vector<1x8x128xf32> to vector<1xf32>
      %36 = vector.shape_cast %35 : vector<1xf32> to vector<1x1x1xf32>
      %37 = vector.extract %36[0, 0, 0] : f32 from vector<1x1x1xf32>
      %c0_16 = arith.constant 0 : index
      %c0_17 = arith.constant 0 : index
      %38 = memref.load %arg4[%c0_16, %c0_17] : memref<1x1xf32, #tpu.memory_space<smem>>
      memref.store %37, %arg4[%c0_16, %c0_17] : memref<1x1xf32, #tpu.memory_space<smem>>
    } else {
    }
    return
  }
  func.func @transform_0(%arg0: i32, %arg1: i32) -> (i32, i32) {
    %c1_i32 = arith.constant 1 : i32
    %0 = arith.muli %arg0, %c1_i32 : i32
    %1 = arith.addi %0, %arg1 : i32
    %c0_i32 = arith.constant 0 : i32
    %2 = arith.minsi %1, %c0_i32 : i32
    %c0_i32_0 = arith.constant 0 : i32
    %c0_i32_1 = arith.constant 0 : i32
    return %2, %c0_i32_0 : i32, i32
  }
  func.func @transform_1(%arg0: i32, %arg1: i32) -> (i32, i32) {
    %c1_i32 = arith.constant 1 : i32
    %0 = arith.muli %arg0, %c1_i32 : i32
    %1 = arith.addi %0, %arg1 : i32
    %c0_i32 = arith.constant 0 : i32
    %2 = arith.minsi %1, %c0_i32 : i32
    %c0_i32_0 = arith.constant 0 : i32
    %c0_i32_1 = arith.constant 0 : i32
    return %2, %c0_i32_0 : i32, i32
  }
  func.func @transform_2(%arg0: i32, %arg1: i32) -> (i32, i32) {
    %c0_i32 = arith.constant 0 : i32
    %c0_i32_0 = arith.constant 0 : i32
    return %arg0, %c0_i32 : i32, i32
  }
}

</mosaic_0001>

<llo_original>
// kernel: tpu_custom_call.1
$region0: #{tpu_custom_call.1}
  #allocation0 [shape = 'u32[]', space=smem, size = 0x4, offset = 0x4, fixed_abs, tag = 'smem constant byte address 0x4 - core index']
  #allocation1 [shape = 'u32[144,128]{1,0:T(1,128)}', space=vmem, size = 0x12000, scoped, tag = 'internal scratch']
  #allocation2 [shape = 'f32[8,128]{1,0:T(8,128)}', space=vmem, size = 0x1000, scoped, tag = 'scratch operand']
  %s0 = inlined_call_operand.hbm [shape: f32[16,128], index: 0, kind: input, shape index: {}]
  %s1 = inlined_call_operand.hbm [shape: f32[16,128], index: 1, kind: input, shape index: {}]
  %s2 = inlined_call_operand.hbm [shape: f32[1,1], index: 2, kind: output, shape index: {}]
  %s3 = sld [smem:[#allocation0]]
  $region42: #{tpu_custom_call.1} parent=0
    _
  %s5 = ssub.s32 1, %s3
  %s6 = scalar_select 0, %s5, %s3
  $region1: #{tpu_custom_call.1} parent=0
    #allocation3 [shape = 'u8[16384]{0}', space=vmem, size = 0x4000, scoped, tag = 'input window, operand 0, single buffered']
    #allocation4 [shape = 's32[1]{0}', space=sflag, size = 0x4, scoped, tag = 'scoped memory for tpu_custom_call.1']
    #allocation5 [shape = 's32[1]{0}', space=sflag, size = 0x4, scoped, tag = 'scoped memory for tpu_custom_call.1']
    #allocation6 [shape = 'u8[16384]{0}', space=vmem, size = 0x4000, scoped, tag = 'input window, operand 1, single buffered']
    #allocation7 [shape = 's32[1]{0}', space=sflag, size = 0x4, scoped, tag = 'scoped memory for tpu_custom_call.1']
    #allocation8 [shape = 'u8[512]{0}', space=smem, size = 0x200, scoped, tag = 'output window, operand 0, single buffered']
    %7 = vsyncpa [#allocation4], 0
    %8 = vsyncpa [#allocation7], 0
    %9 = vsyncpa [#allocation5], 0
    // Predicated region
    $region2: #{tpu_custom_call.1} parent=1 // pred_check
      _
    $region3: #{tpu_custom_call.1} parent=1 // pred_check_branch
      %11 = sbr.rel (0) target = $region5
    $region4: #{tpu_custom_call.1} parent=1 // pred_region
      %s12 = sadd.s32 0, 0
      %p13 = scmp.lt.s32.totalorder %s12, 0
      %s14 = scalar_select %p13, %s12, 0
      %s15 = smul.u32 4, %s14
      %s16 = ssub.s32 2, %s15
      %s17 = smul.u32 128, %s16
      %s19 = ssub.s32 512, %s17
      %20 = vsyncadd [#allocation4], %s19
      %p21 = scmp.ne.s32.totalorder 0, %s17
      %s22 = smul.addr %s15, 128
      %s23 = scalar_lea.hbm %s0, %s22
      %s24 = smul.u32 8, %s16
      %s25 = sshll.u32 [#allocation3], 4
      %s26 = int_to_ptr.vmem [resolvable:$true] %s25
      %s27 = sshll.u32 %s24, 4
      %31 = dma.hbm_to_vmem [thread:$0]  (%p21), %s23, %s27, %s26, [#allocation4], 128, 128, 8
    $region5: #{tpu_custom_call.1} parent=1 // pred_fallthru
      _
    // Predicated region
    $region6: #{tpu_custom_call.1} parent=1 // pred_check
      _
    $region7: #{tpu_custom_call.1} parent=1 // pred_check_branch
      %33 = sbr.rel (0) target = $region9
    $region8: #{tpu_custom_call.1} parent=1 // pred_region
      %s34 = sadd.s32 0, 0
      %p35 = scmp.lt.s32.totalorder %s34, 0
      %s36 = scalar_select %p35, %s34, 0
      %s37 = smul.u32 4, %s36
      %s38 = ssub.s32 2, %s37
      %s39 = smul.u32 128, %s38
      %s41 = ssub.s32 512, %s39
      %42 = vsyncadd [#allocation7], %s41
      %p43 = scmp.ne.s32.totalorder 0, %s39
      %s44 = smul.addr %s37, 128
      %s45 = scalar_lea.hbm %s1, %s44
      %s46 = smul.u32 8, %s38
      %s47 = sshll.u32 [#allocation6], 4
      %s48 = int_to_ptr.vmem [resolvable:$true] %s47
      %s49 = sshll.u32 %s46, 4
      %53 = dma.hbm_to_vmem [thread:$0]  (%p43), %s45, %s49, %s48, [#allocation7], 128, 128, 8
    $region9: #{tpu_custom_call.1} parent=1 // pred_fallthru
      _
    // Predicated region
    $region10: #{tpu_custom_call.1} parent=1 // pred_check
      _
    $region11: #{tpu_custom_call.1} parent=1 // pred_check_branch
      %55 = sbr.rel (0) target = $region13
    $region12: #{tpu_custom_call.1} parent=1 // pred_region
      %56 = dma.done [#allocation4], 512
    $region13: #{tpu_custom_call.1} parent=1 // pred_fallthru
      _
    // Predicated region
    $region14: #{tpu_custom_call.1} parent=1 // pred_check
      _
    $region15: #{tpu_custom_call.1} parent=1 // pred_check_branch
      %58 = sbr.rel (0) target = $region17
    $region16: #{tpu_custom_call.1} parent=1 // pred_region
      %59 = dma.done [#allocation7], 512
    $region17: #{tpu_custom_call.1} parent=1 // pred_fallthru
      _
    %s60 = sadd.s32 0, 0
    %p61 = scmp.lt.s32.totalorder %s60, 0
    %s62 = scalar_select %p61, %s60, 0
    %s63 = smul.u32 4, %s62
    %s64 = ssub.s32 2, %s63
    %s65 = smul.u32 128, %s64
    %s66 = sadd.s32 0, 0
    %p67 = scmp.lt.s32.totalorder %s66, 0
    %s68 = scalar_select %p67, %s66, 0
    %s69 = smul.u32 4, %s68
    %s70 = ssub.s32 2, %s69
    %s71 = smul.u32 128, %s70
    %p72 = scmp.eq.s32.totalorder 0, 0
    // Predicated region
    $region18: #{tpu_custom_call.1} parent=1 // pred_check
      %p73 = pneg %p72
    $region19: #{tpu_custom_call.1} parent=1 // pred_check_branch
      %75 = sbr.rel (%p73) target = $region21
    $region20: #{tpu_custom_call.1} parent=1 // pred_region
      %76 = vst [vmem:[#allocation2] sm:$0xff] 0.0
    $region21: #{tpu_custom_call.1} parent=1 // pred_fallthru
      _
    %v77 = vld [vmem:[#allocation3] sm:$0xff]
    %v78 = vld [vmem:[#allocation3 + $0x8] sm:$0xff]
    %v79 = vld [vmem:[#allocation3 + $0x10] sm:$0xff]
    %v80 = vld [vmem:[#allocation3 + $0x18] sm:$0xff]
    %v81 = vld [vmem:[#allocation6] sm:$0xff]
    %v82 = vld [vmem:[#allocation6 + $0x8] sm:$0xff]
    %v83 = vld [vmem:[#allocation6 + $0x10] sm:$0xff]
    %v84 = vld [vmem:[#allocation6 + $0x18] sm:$0xff]
    %v85 = vlog2.pop %v77
    %v86 = vmul.f32 %v85, 0.6931472
    %v87 = vlog2.pop %v78
    %v88 = vmul.f32 %v87, 0.6931472
    %v89 = vlog2.pop %v79
    %v90 = vmul.f32 %v89, 0.6931472
    %v91 = vlog2.pop %v80
    %v92 = vmul.f32 %v91, 0.6931472
    %v93 = vmax.f32 %v86, -100.0
    %v94 = vmax.f32 %v88, -100.0
    %v95 = vmax.f32 %v90, -100.0
    %v96 = vmax.f32 %v92, -100.0
    %v97 = vsub.f32 1.0, %v77
    %v98 = vsub.f32 1.0, %v78
    %v99 = vsub.f32 1.0, %v79
    %v100 = vsub.f32 1.0, %v80
    %v101 = vlog2.pop %v97
    %v102 = vmul.f32 %v101, 0.6931472
    %v103 = vlog2.pop %v98
    %v104 = vmul.f32 %v103, 0.6931472
    %v105 = vlog2.pop %v99
    %v106 = vmul.f32 %v105, 0.6931472
    %v107 = vlog2.pop %v100
    %v108 = vmul.f32 %v107, 0.6931472
    %v109 = vmax.f32 %v102, -100.0
    %v110 = vmax.f32 %v104, -100.0
    %v111 = vmax.f32 %v106, -100.0
    %v112 = vmax.f32 %v108, -100.0
    %v113 = vmul.f32 %v81, %v93
    %v114 = vmul.f32 %v82, %v94
    %v115 = vmul.f32 %v83, %v95
    %v116 = vmul.f32 %v84, %v96
    %v117 = vsub.f32 1.0, %v81
    %v118 = vsub.f32 1.0, %v82
    %v119 = vsub.f32 1.0, %v83
    %v120 = vsub.f32 1.0, %v84
    %v121 = vmul.f32 %v117, %v109
    %v122 = vmul.f32 %v118, %v110
    %v123 = vmul.f32 %v119, %v111
    %v124 = vmul.f32 %v120, %v112
    %v125 = vadd.f32 %v113, %v121
    %v126 = vadd.f32 %v114, %v122
    %v127 = vadd.f32 %v115, %v123
    %v128 = vadd.f32 %v116, %v124
    %v129 = vsub.f32 0.0, %v125
    %v130 = vsub.f32 0.0, %v126
    %v131 = vsub.f32 0.0, %v127
    %v132 = vsub.f32 0.0, %v128
    %s133 = sadd.s32 0, 0
    %s134 = sadd.s32 %s133, 1
    %s135 = smul.u32 %s134, 32
    %p136 = scmp.gt.s32.totalorder %s135, 16
    %p137 = scmp.le.s32.totalorder %s135, 16
    // Predicated region
    $region22: #{tpu_custom_call.1} parent=1 // pred_check
      %p138 = pneg %p137
    $region23: #{tpu_custom_call.1} parent=1 // pred_check_branch
      %140 = sbr.rel (%p138) target = $region25
    $region24: #{tpu_custom_call.1} parent=1 // pred_region
      %v141 = vld [vmem:[#allocation2] sm:$0xff]
      %v142 = vadd.f32 %v129, %v130
      %v143 = vadd.f32 %v142, %v131
      %v144 = vadd.f32 %v143, %v132
      %v145 = vadd.f32 %v141, %v144
      %146 = vst [vmem:[#allocation2] sm:$0xff] %v145
    $region25: #{tpu_custom_call.1} parent=1 // pred_fallthru
      _
    // Predicated region
    $region26: #{tpu_custom_call.1} parent=1 // pred_check
      %p147 = pneg %p136
    $region27: #{tpu_custom_call.1} parent=1 // pred_check_branch
      %149 = sbr.rel (%p147) target = $region29
    $region28: #{tpu_custom_call.1} parent=1 // pred_region
      %s150 = smul.u32 %s133, 32
      %v151 = vlaneseq
      %v152 = vshrl.u32 %v151, 7
      %v153 = vadd.s32 %v152, 8
      %v154 = vadd.s32 %v152, 16
      %v155 = vadd.s32 %v152, 24
      %v156 = vstv %s150
      %v157 = vadd.s32 %v156, %v152
      %v158 = vadd.s32 %v156, %v153
      %v159 = vadd.s32 %v156, %v154
      %v160 = vadd.s32 %v156, %v155
      %vm161 = vcmp.lt.s32.totalorder %v157, 16
      %vm162 = vcmp.lt.s32.totalorder %v158, 16
      %vm163 = vcmp.lt.s32.totalorder %v159, 16
      %vm164 = vcmp.lt.s32.totalorder %v160, 16
      %v165 = vsel %vm161, %v129, 0.0
      %v166 = vsel %vm162, %v130, 0.0
      %v167 = vsel %vm163, %v131, 0.0
      %v168 = vsel %vm164, %v132, 0.0
      %v169 = vld [vmem:[#allocation2] sm:$0xff]
      %v170 = vadd.f32 %v165, %v166
      %v171 = vadd.f32 %v170, %v167
      %v172 = vadd.f32 %v171, %v168
      %v173 = vadd.f32 %v169, %v172
      %174 = vst [vmem:[#allocation2] sm:$0xff] %v173
    $region29: #{tpu_custom_call.1} parent=1 // pred_fallthru
      _
    // Predicated region
    $region30: #{tpu_custom_call.1} parent=1 // pred_check
      %p175 = pneg %p72
    $region31: #{tpu_custom_call.1} parent=1 // pred_check_branch
      %177 = sbr.rel (%p175) target = $region33
    $region32: #{tpu_custom_call.1} parent=1 // pred_region
      %v178 = vld [vmem:[#allocation2] sm:$0xff]
      %179 = vadd.xlane.f32.xlu0 %v178
      %v180 = vpop.xlane.xlu0 %179
      %v181 = vrot.slane %v180, 4
      %v182 = vadd.f32 %v180, %v181
      %v183 = vrot.slane %v182, 2
      %v184 = vadd.f32 %v182, %v183
      %v185 = vrot.slane %v184, 1
      %v186 = vadd.f32 %v184, %v185
      %s187 = vtos %v186
      %s188 = scalar_lea.smem [#allocation8], 0
      %189 = sst [smem:[%s188]] %s187
    $region33: #{tpu_custom_call.1} parent=1 // pred_fallthru
      _
    // Predicated region
    $region34: #{tpu_custom_call.1} parent=1 // pred_check
      _
    $region35: #{tpu_custom_call.1} parent=1 // pred_check_branch
      %191 = sbr.rel (0) target = $region37
    $region36: #{tpu_custom_call.1} parent=1 // pred_region
      %s193 = ssub.s32 16, 16
      %194 = vsyncadd [#allocation5], %s193
      %197 = dma.smem_to_hbm [#allocation8], 16, %s2, [#allocation5]
    $region37: #{tpu_custom_call.1} parent=1 // pred_fallthru
      _
    // Predicated region
    $region38: #{tpu_custom_call.1} parent=1 // pred_check
      _
    $region39: #{tpu_custom_call.1} parent=1 // pred_check_branch
      %199 = sbr.rel (0) target = $region41
    $region40: #{tpu_custom_call.1} parent=1 // pred_region
      %200 = dma.done [#allocation5], 16
    $region41: #{tpu_custom_call.1} parent=1 // pred_fallthru
      _
    %201 = sfence
    %202 = vsyncpa [#allocation4], 1
    %203 = vsyncpa [#allocation7], 1
    %204 = vsyncpa [#allocation5], 1

</llo_original>
